<compile_context>
chip_gen: v6e
topology: v6e:2x2x1
jax: 0.10.0
libtpu: 0.0.40
codegen_flags: <defaults>
</compile_context>

<pallas_src>
import jax
import jax.numpy as jnp
from jax.experimental import pallas as pl
from jax.experimental.pallas import tpu as pltpu

_LANES = 128
_FEATURES = 2                        # torch.nn.Linear(2, 1)
_ROW_WIDTH = _FEATURES * _LANES      # 256: one interleaved row = 128 batch elements


def _round_up(n, m):
    return ((n + m - 1) // m) * m


def _linear_sigmoid_kernel(x_ref, sel_ref, params_ref, o_ref):
    # x_ref:      (tb, 256) f32   lane-interleaved rows [x0, x1, x0, x1, ...]
    # sel_ref:    (256, 256) bf16 0/1 de-interleave matrix (exact in bf16)
    # params_ref: (3,) f32 SMEM   [w00, w01, b0]
    # o_ref:      (tb, 128) f32   sigmoid(linear) per batch element, lane-dense
    x = x_ref[...]
    sel = sel_ref[...]

    # Exact bf16x3 split of x so the MXU de-interleave reproduces f32 values
    # (error ~2^-24) independent of the hardware's default matmul precision.
    x_hi = x.astype(jnp.bfloat16)
    r1 = x - x_hi.astype(jnp.float32)
    x_mid = r1.astype(jnp.bfloat16)
    r2 = r1 - x_mid.astype(jnp.float32)
    x_lo = r2.astype(jnp.bfloat16)

    d = (jnp.dot(x_hi, sel, preferred_element_type=jnp.float32)
         + jnp.dot(x_mid, sel, preferred_element_type=jnp.float32)
         + jnp.dot(x_lo, sel, preferred_element_type=jnp.float32))
    x0 = d[:, :_LANES]          # feature 0, one batch element per lane
    x1 = d[:, _LANES:]          # feature 1

    w0 = params_ref[0]
    w1 = params_ref[1]
    b = params_ref[2]
    y = x0 * w0 + x1 * w1 + b                    # VPU FMAs, exact f32 weights

    # sigmoid(y) = 0.5 * tanh(0.5 * y) + 0.5 : single EUP op, no f32 divide.
    # (Output kept f32 to preserve module semantics; cast to bf16 here if the
    #  consumer tolerates it to shave ~1/3 of store traffic.)
    o_ref[...] = 0.5 * jnp.tanh(0.5 * y) + 0.5


def simple_model_forward(x, weight, bias, *, block_rows=2048, min_pallas_batch=32768):
    """sigmoid(x @ weight.T + bias) for Linear(2, 1), batch laid out lane-dense.

    x:      (B, 2)  float-like
    weight: (1, 2)
    bias:   (1,)
    returns (B, 1)  float32
    """
    B, IN = x.shape
    OUT, IN2 = weight.shape
    assert IN == _FEATURES and IN2 == _FEATURES and OUT == 1, "SimpleModel is Linear(2, 1)"

    xf = x.astype(jnp.float32)
    wf = weight.astype(jnp.float32)
    bf = bias.astype(jnp.float32)

    # Small-batch fallback: one fused XLA op beats custom-call dispatch + plumbing.
    if B < min_pallas_batch:
        return jax.nn.sigmoid(xf @ wf.T + bf)

    # ---- input layout: one interleaved slab, zero-copy when B % 128 == 0 ------
    rows = pl.cdiv(B, _LANES)
    rows_padded = max(rows, 8)                 # keep the matmul M-dim >= 8 sublanes
    flat = xf.reshape(-1)                      # row-major => already interleaved
    n_needed = rows_padded * _ROW_WIDTH
    if n_needed != flat.shape[0]:
        flat = jnp.pad(flat, (0, n_needed - flat.shape[0]))
    x_slab = flat.reshape(rows_padded, _ROW_WIDTH)

    # Row tiling: multiple of 8 (tiling rule), >=2 grid steps when possible so the
    # "parallel" axis can be sharded across v7x's two TensorCores, and small enough
    # (default 2048 rows -> ~6.5 MiB live) for v5e's 16 MiB default scoped VMEM.
    block_rows = max(8, _round_up(block_rows, 8))
    tb = min(block_rows, max(8, _round_up(pl.cdiv(rows_padded, 2), 8)))
    num_blocks = pl.cdiv(rows_padded, tb)      # partial last block is masked by Pallas

    # 0/1 de-interleave matrix: column k<128 picks lane 2k (feature 0),
    # column 128+k picks lane 2k+1 (feature 1).  Exactly representable in bf16.
    row_idx = jnp.arange(_ROW_WIDTH)[:, None]
    col_idx = jnp.arange(_ROW_WIDTH)[None, :]
    pick = jnp.where(col_idx < _LANES, 2 * col_idx, 2 * (col_idx - _LANES) + 1)
    sel = (row_idx == pick).astype(jnp.bfloat16)                     # (256, 256)

    params = jnp.concatenate([wf.reshape(-1), bf.reshape(-1)])       # [w0, w1, b]

    out = pl.pallas_call(
        _linear_sigmoid_kernel,
        out_shape=jax.ShapeDtypeStruct((rows_padded, _LANES), jnp.float32),
        grid=(num_blocks,),
        in_specs=[
            pl.BlockSpec((tb, _ROW_WIDTH), lambda i: (i, 0)),        # interleaved x rows
            pl.BlockSpec((_ROW_WIDTH, _ROW_WIDTH), lambda i: (0, 0)),  # sel (fetched once)
            pl.BlockSpec(memory_space=pltpu.MemorySpace.SMEM),       # [w0, w1, b]
        ],
        out_specs=pl.BlockSpec((tb, _LANES), lambda i: (i, 0)),
        compiler_params=pltpu.CompilerParams(
            dimension_semantics=("parallel",),                       # batch tiles independent
        ),
    )(x_slab, sel, params)

    # Free (pure reshape) when B is a multiple of 128; otherwise one small slice.
    return out.reshape(-1)[:B].reshape(B, OUT)


if __name__ == "__main__":
    key = jax.random.PRNGKey(0)
    k_x, k_w, k_b, k_x2 = jax.random.split(key, 4)

    B, IN, OUT = 8, 2, 1

    # Deterministic parameter init (mimics torch Linear's uniform(-1/sqrt(in), 1/sqrt(in)))
    bound = 1.0 / jnp.sqrt(jnp.float32(IN))
    weight = jax.random.uniform(k_w, (OUT, IN), jnp.float32, -bound, bound)
    bias = jax.random.uniform(k_b, (OUT,), jnp.float32, -bound, bound)

    x = jax.random.normal(k_x, (B, IN), jnp.float32)

    # 1) Force the Pallas path even at tiny batch (default would take the XLA fallback).
    out = simple_model_forward(x, weight, bias, min_pallas_batch=0)
    jax.block_until_ready(out)
    ref = jax.nn.sigmoid(x @ weight.T + bias)
    assert out.shape == (B, OUT)
    assert jnp.allclose(out, ref, atol=1e-5), (out, ref)

    # 2) Larger case exercising a multi-step grid, a partial last block and the pad tail.
    B2 = 2500
    x2 = jax.random.normal(k_x2, (B2, IN), jnp.float32)
    out2 = simple_model_forward(x2, weight, bias, min_pallas_batch=0, block_rows=8)
    jax.block_until_ready(out2)
    ref2 = jax.nn.sigmoid(x2 @ weight.T + bias)
    assert out2.shape == (B2, OUT)
    assert jnp.allclose(out2, ref2, atol=1e-5)

    # 3) Default small-batch XLA fallback path.
    out3 = simple_model_forward(x, weight, bias)
    assert jnp.allclose(out3, ref, atol=1e-6)

    print("KERNEL_OK")
</pallas_src>

<mosaic_0001>
module attributes {stable_mosaic.version = 11 : i64} {
  func.func @_linear_sigmoid_kernel(%arg0: i32, %arg1: memref<8x256xf32, #tpu.memory_space<vmem>>, %arg2: memref<256x256xbf16, #tpu.memory_space<vmem>>, %arg3: memref<3xf32, #tpu.memory_space<smem>>, %arg4: memref<8x128xf32, #tpu.memory_space<vmem>>) attributes {dimension_semantics = [#tpu.dimension_semantics<parallel>], iteration_bounds = array<i64: 1>, scalar_prefetch = 0 : i64, scratch_operands = 0 : i64, tpu.core_type = #tpu.core_type<tc>, window_params = [{transform_indices = @transform_0, window_bounds = array<i64: 8, 256>}, {pipeline_mode = #tpu.pipeline_mode<synchronous>, transform_indices = @transform_1, window_bounds = array<i64: 256, 256>}, {transform_indices = @transform_2, window_bounds = array<i64: 3>}, {transform_indices = @transform_3, window_bounds = array<i64: 8, 128>}]} {
    %c0 = arith.constant 0 : index
    %c0_0 = arith.constant 0 : index
    %0 = vector.load %arg1[%c0, %c0_0] : memref<8x256xf32, #tpu.memory_space<vmem>>, vector<8x256xf32>
    %c0_1 = arith.constant 0 : index
    %c0_2 = arith.constant 0 : index
    %1 = vector.load %arg2[%c0_1, %c0_2] : memref<256x256xbf16, #tpu.memory_space<vmem>>, vector<256x256xbf16>
    %2 = arith.truncf %0 : vector<8x256xf32> to vector<8x256xbf16>
    %3 = arith.extf %2 : vector<8x256xbf16> to vector<8x256xf32>
    %4 = arith.subf %0, %3 : vector<8x256xf32>
    %5 = arith.truncf %4 : vector<8x256xf32> to vector<8x256xbf16>
    %6 = arith.extf %5 : vector<8x256xbf16> to vector<8x256xf32>
    %7 = arith.subf %4, %6 : vector<8x256xf32>
    %8 = arith.truncf %7 : vector<8x256xf32> to vector<8x256xbf16>
    %cst = arith.constant dense<0.000000e+00> : vector<8x256xf32>
    %9 = tpu.matmul %2, %1, %cst {dimension_numbers = #tpu.dot_dimension_numbers<[1], [0], [0], [1], [0, 0, 1, 1], [], []>} : vector<8x256xbf16>, vector<256x256xbf16>, vector<8x256xf32> -> vector<8x256xf32>
    %cst_3 = arith.constant dense<0.000000e+00> : vector<8x256xf32>
    %10 = tpu.matmul %5, %1, %cst_3 {dimension_numbers = #tpu.dot_dimension_numbers<[1], [0], [0], [1], [0, 0, 1, 1], [], []>} : vector<8x256xbf16>, vector<256x256xbf16>, vector<8x256xf32> -> vector<8x256xf32>
    %11 = arith.addf %9, %10 : vector<8x256xf32>
    %cst_4 = arith.constant dense<0.000000e+00> : vector<8x256xf32>
    %12 = tpu.matmul %8, %1, %cst_4 {dimension_numbers = #tpu.dot_dimension_numbers<[1], [0], [0], [1], [0, 0, 1, 1], [], []>} : vector<8x256xbf16>, vector<256x256xbf16>, vector<8x256xf32> -> vector<8x256xf32>
    %13 = arith.addf %11, %12 : vector<8x256xf32>
    %14 = vector.extract_strided_slice %13 {offsets = [0, 0], sizes = [8, 128], strides = [1, 1]} : vector<8x256xf32> to vector<8x128xf32>
    %15 = vector.extract_strided_slice %13 {offsets = [0, 128], sizes = [8, 128], strides = [1, 1]} : vector<8x256xf32> to vector<8x128xf32>
    %c0_5 = arith.constant 0 : index
    %16 = memref.load %arg3[%c0_5] : memref<3xf32, #tpu.memory_space<smem>>
    %c1 = arith.constant 1 : index
    %17 = memref.load %arg3[%c1] : memref<3xf32, #tpu.memory_space<smem>>
    %c2 = arith.constant 2 : index
    %18 = memref.load %arg3[%c2] : memref<3xf32, #tpu.memory_space<smem>>
    %19 = vector.broadcast %16 : f32 to vector<8x128xf32>
    %20 = arith.mulf %14, %19 : vector<8x128xf32>
    %21 = vector.broadcast %17 : f32 to vector<8x128xf32>
    %22 = arith.mulf %15, %21 : vector<8x128xf32>
    %23 = arith.addf %20, %22 : vector<8x128xf32>
    %24 = vector.broadcast %18 : f32 to vector<8x128xf32>
    %25 = arith.addf %23, %24 : vector<8x128xf32>
    %cst_6 = arith.constant 5.000000e-01 : f32
    %26 = vector.broadcast %cst_6 : f32 to vector<8x128xf32>
    %27 = arith.mulf %26, %25 : vector<8x128xf32>
    %28 = math.tanh %27 : vector<8x128xf32>
    %cst_7 = arith.constant 5.000000e-01 : f32
    %29 = vector.broadcast %cst_7 : f32 to vector<8x128xf32>
    %30 = arith.mulf %29, %28 : vector<8x128xf32>
    %cst_8 = arith.constant 5.000000e-01 : f32
    %31 = vector.broadcast %cst_8 : f32 to vector<8x128xf32>
    %32 = arith.addf %30, %31 : vector<8x128xf32>
    %c0_9 = arith.constant 0 : index
    %c0_10 = arith.constant 0 : index
    %33 = vector.load %arg4[%c0_9, %c0_10] : memref<8x128xf32, #tpu.memory_space<vmem>>, vector<8x128xf32>
    tpu.vector_store %arg4[%c0_9, %c0_10], %32 {strides = array<i32>} : memref<8x128xf32, #tpu.memory_space<vmem>>, vector<8x128xf32>,
    return
  }
  func.func @transform_0(%arg0: i32) -> (i32, i32) {
    %c0_i32 = arith.constant 0 : i32
    %c0_i32_0 = arith.constant 0 : i32
    return %arg0, %c0_i32 : i32, i32
  }
  func.func @transform_1(%arg0: i32) -> (i32, i32) {
    %c0_i32 = arith.constant 0 : i32
    %c0_i32_0 = arith.constant 0 : i32
    %c0_i32_1 = arith.constant 0 : i32
    return %c0_i32, %c0_i32_0 : i32, i32
  }
  func.func @transform_2(%arg0: i32) -> i32 {
    %c0_i32 = arith.constant 0 : i32
    %c0_i32_0 = arith.constant 0 : i32
    return %c0_i32 : i32
  }
  func.func @transform_3(%arg0: i32) -> (i32, i32) {
    %c0_i32 = arith.constant 0 : i32
    %c0_i32_0 = arith.constant 0 : i32
    return %arg0, %c0_i32 : i32, i32
  }
}

</mosaic_0001>

<llo_original>
// kernel: tpu_custom_call.1
$region0: #{tpu_custom_call.1}
  #allocation0 [shape = 'u32[]', space=smem, size = 0x4, offset = 0x4, fixed_abs, tag = 'smem constant byte address 0x4 - core index']
  #allocation1 [shape = 'u32[144,128]{1,0:T(1,128)}', space=vmem, size = 0x12000, scoped, tag = 'internal scratch']
  %s0 = inlined_call_operand.hbm [shape: f32[8,256], index: 0, kind: input, shape index: {}]
  %s1 = inlined_call_operand.hbm [shape: bf16[256,256], index: 1, kind: input, shape index: {}]
  %s2 = inlined_call_operand.vmem [shape: f32[3], index: 2, kind: input, shape index: {}]
  %s3 = inlined_call_operand.hbm [shape: f32[8,128], index: 3, kind: output, shape index: {}]
  %s4 = sld [smem:[#allocation0]]
  $region34: #{tpu_custom_call.1} parent=0
    _
  %s6 = ssub.s32 1, %s4
  %s7 = scalar_select 0, %s6, %s4
  $region1: #{tpu_custom_call.1} parent=0
    #allocation2 [shape = 'u8[8192]{0}', space=vmem, size = 0x2000, scoped, tag = 'input window, operand 0, single buffered']
    #allocation3 [shape = 's32[1]{0}', space=sflag, size = 0x4, scoped, tag = 'scoped memory for tpu_custom_call.1']
    #allocation4 [shape = 's32[1]{0}', space=sflag, size = 0x4, scoped, tag = 'scoped memory for tpu_custom_call.1']
    #allocation5 [shape = 's32[1]{0}', space=sflag, size = 0x4, scoped, tag = 'scoped memory for tpu_custom_call.1']
    #allocation6 [shape = 'u8[131072]{0}', space=vmem, size = 0x20000, scoped, tag = 'input window, operand 1, single buffered']
    #allocation7 [shape = 's32[1]{0}', space=sflag, size = 0x4, scoped, tag = 'scoped memory for tpu_custom_call.1']
    #allocation8 [shape = 'u8[512]{0}', space=smem, size = 0x200, scoped, tag = 'input window, operand 2, single buffered']
    #allocation9 [shape = 'u8[4096]{0}', space=vmem, size = 0x1000, scoped, tag = 'output window, operand 0, single buffered']
    %8 = vsyncpa [#allocation3], 0
    %9 = vsyncpa [#allocation7], 0
    %10 = vsyncpa [#allocation5], 0
    %11 = vsyncpa [#allocation4], 0
    // Predicated region
    $region2: #{tpu_custom_call.1} parent=1 // pred_check
      _
    $region3: #{tpu_custom_call.1} parent=1 // pred_check_branch
      %13 = sbr.rel (0) target = $region5
    $region4: #{tpu_custom_call.1} parent=1 // pred_region
      %s15 = ssub.s32 256, 256
      %16 = vsyncadd [#allocation3], %s15
      %s18 = sshll.u32 [#allocation2], 4
      %s19 = int_to_ptr.vmem [resolvable:$true] %s18
      %21 = dma.hbm_to_vmem [thread:$0]  %s0, 256, %s19, [#allocation3]
    $region5: #{tpu_custom_call.1} parent=1 // pred_fallthru
      _
    // Predicated region
    $region6: #{tpu_custom_call.1} parent=1 // pred_check
      _
    $region7: #{tpu_custom_call.1} parent=1 // pred_check_branch
      %23 = sbr.rel (0) target = $region9
    $region8: #{tpu_custom_call.1} parent=1 // pred_region
      %s25 = ssub.s32 4096, 4096
      %26 = vsyncadd [#allocation7], %s25
      %s27 = sshll.u32 [#allocation6], 4
      %s28 = int_to_ptr.vmem [resolvable:$true] %s27
      %33 = dma.hbm_to_vmem [thread:$0]  %s1, 4096, %s28, [#allocation7], 128, 128, 8
    $region9: #{tpu_custom_call.1} parent=1 // pred_fallthru
      _
    // Predicated region
    $region10: #{tpu_custom_call.1} parent=1 // pred_check
      _
    $region11: #{tpu_custom_call.1} parent=1 // pred_check_branch
      %35 = sbr.rel (0) target = $region13
    $region12: #{tpu_custom_call.1} parent=1 // pred_region
      %s37 = ssub.s32 16, 16
      %38 = vsyncadd [#allocation5], %s37
      %s40 = sshll.u32 %s2, 4
      %s41 = int_to_ptr.vmem [resolvable:$true] %s40
      %43 = dma.vmem_to_smem %s41, 16, [#allocation8], [#allocation5]
    $region13: #{tpu_custom_call.1} parent=1 // pred_fallthru
      _
    // Predicated region
    $region14: #{tpu_custom_call.1} parent=1 // pred_check
      _
    $region15: #{tpu_custom_call.1} parent=1 // pred_check_branch
      %45 = sbr.rel (0) target = $region17
    $region16: #{tpu_custom_call.1} parent=1 // pred_region
      %46 = dma.done [#allocation3], 256
    $region17: #{tpu_custom_call.1} parent=1 // pred_fallthru
      _
    // Predicated region
    $region18: #{tpu_custom_call.1} parent=1 // pred_check
      _
    $region19: #{tpu_custom_call.1} parent=1 // pred_check_branch
      %48 = sbr.rel (0) target = $region21
    $region20: #{tpu_custom_call.1} parent=1 // pred_region
      %49 = dma.done [#allocation7], 4096
    $region21: #{tpu_custom_call.1} parent=1 // pred_fallthru
      _
    // Predicated region
    $region22: #{tpu_custom_call.1} parent=1 // pred_check
      _
    $region23: #{tpu_custom_call.1} parent=1 // pred_check_branch
      %51 = sbr.rel (0) target = $region25
    $region24: #{tpu_custom_call.1} parent=1 // pred_region
      %52 = dma.done [#allocation5], 16
    $region25: #{tpu_custom_call.1} parent=1 // pred_fallthru
      _
    %53 = sfence
    %v54 = vld [vmem:[#allocation2] sm:$0xff]
    %v55 = vld [vmem:[#allocation2 + $0x8] sm:$0xff]
    %v56 = vld [vmem:[#allocation6] sm:$0xff]
    %v57 = vld [vmem:[#allocation6 + $0x8] sm:$0xff]
    %v58 = vld [vmem:[#allocation6 + $0x10] sm:$0xff]
    %v59 = vld [vmem:[#allocation6 + $0x18] sm:$0xff]
    %v60 = vld [vmem:[#allocation6 + $0x20] sm:$0xff]
    %v61 = vld [vmem:[#allocation6 + $0x28] sm:$0xff]
    %v62 = vld [vmem:[#allocation6 + $0x30] sm:$0xff]
    %v63 = vld [vmem:[#allocation6 + $0x38] sm:$0xff]
    %v64 = vld [vmem:[#allocation6 + $0x40] sm:$0xff]
    %v65 = vld [vmem:[#allocation6 + $0x48] sm:$0xff]
    %v66 = vld [vmem:[#allocation6 + $0x50] sm:$0xff]
    %v67 = vld [vmem:[#allocation6 + $0x58] sm:$0xff]
    %v68 = vld [vmem:[#allocation6 + $0x60] sm:$0xff]
    %v69 = vld [vmem:[#allocation6 + $0x68] sm:$0xff]
    %v70 = vld [vmem:[#allocation6 + $0x70] sm:$0xff]
    %v71 = vld [vmem:[#allocation6 + $0x78] sm:$0xff]
    %v72 = vld [vmem:[#allocation6 + $0x80] sm:$0xff]
    %v73 = vld [vmem:[#allocation6 + $0x88] sm:$0xff]
    %v74 = vld [vmem:[#allocation6 + $0x90] sm:$0xff]
    %v75 = vld [vmem:[#allocation6 + $0x98] sm:$0xff]
    %v76 = vld [vmem:[#allocation6 + $0xa0] sm:$0xff]
    %v77 = vld [vmem:[#allocation6 + $0xa8] sm:$0xff]
    %v78 = vld [vmem:[#allocation6 + $0xb0] sm:$0xff]
    %v79 = vld [vmem:[#allocation6 + $0xb8] sm:$0xff]
    %v80 = vld [vmem:[#allocation6 + $0xc0] sm:$0xff]
    %v81 = vld [vmem:[#allocation6 + $0xc8] sm:$0xff]
    %v82 = vld [vmem:[#allocation6 + $0xd0] sm:$0xff]
    %v83 = vld [vmem:[#allocation6 + $0xd8] sm:$0xff]
    %v84 = vld [vmem:[#allocation6 + $0xe0] sm:$0xff]
    %v85 = vld [vmem:[#allocation6 + $0xe8] sm:$0xff]
    %v86 = vld [vmem:[#allocation6 + $0xf0] sm:$0xff]
    %v87 = vld [vmem:[#allocation6 + $0xf8] sm:$0xff]
    %v88 = vpack.c.bf16 %v54, %v54
    %v89 = vpack.c.bf16 %v55, %v55
    %v90 = vunpack.c.l.bf16 %v88
    %v91 = vunpack.c.l.bf16 %v89
    %v92 = vsub.f32 %v54, %v90
    %v93 = vsub.f32 %v55, %v91
    %v94 = vpack.c.bf16 %v92, %v92
    %v95 = vpack.c.bf16 %v93, %v93
    %v96 = vunpack.c.l.bf16 %v94
    %v97 = vunpack.c.l.bf16 %v95
    %v98 = vsub.f32 %v92, %v96
    %v99 = vsub.f32 %v93, %v97
    %v100 = vpack.c.bf16 %v98, %v98
    %v101 = vpack.c.bf16 %v99, %v99
    %v134 = vunpack.c.l.b16 %v56
    %v135 = vunpack.c.h.b16 %v56
    %v136 = vunpack.c.l.b16 %v57
    %v137 = vunpack.c.h.b16 %v57
    %v138 = vunpack.c.l.b16 %v58
    %v139 = vunpack.c.h.b16 %v58
    %v140 = vunpack.c.l.b16 %v59
    %v141 = vunpack.c.h.b16 %v59
    %v142 = vunpack.c.l.b16 %v60
    %v143 = vunpack.c.h.b16 %v60
    %v144 = vunpack.c.l.b16 %v61
    %v145 = vunpack.c.h.b16 %v61
    %v146 = vunpack.c.l.b16 %v62
    %v147 = vunpack.c.h.b16 %v62
    %v148 = vunpack.c.l.b16 %v63
    %v149 = vunpack.c.h.b16 %v63
    %v150 = vunpack.c.l.b16 %v64
    %v151 = vunpack.c.h.b16 %v64
    %v152 = vunpack.c.l.b16 %v65
    %v153 = vunpack.c.h.b16 %v65
    %v154 = vunpack.c.l.b16 %v66
    %v155 = vunpack.c.h.b16 %v66
    %v156 = vunpack.c.l.b16 %v67
    %v157 = vunpack.c.h.b16 %v67
    %v158 = vunpack.c.l.b16 %v68
    %v159 = vunpack.c.h.b16 %v68
    %v160 = vunpack.c.l.b16 %v69
    %v161 = vunpack.c.h.b16 %v69
    %v162 = vunpack.c.l.b16 %v70
    %v163 = vunpack.c.h.b16 %v70
    %v164 = vunpack.c.l.b16 %v71
    %v165 = vunpack.c.h.b16 %v71
    %v166 = vunpack.c.l.b16 %v72
    %v167 = vunpack.c.h.b16 %v72
    %v168 = vunpack.c.l.b16 %v73
    %v169 = vunpack.c.h.b16 %v73
    %v170 = vunpack.c.l.b16 %v74
    %v171 = vunpack.c.h.b16 %v74
    %v172 = vunpack.c.l.b16 %v75
    %v173 = vunpack.c.h.b16 %v75
    %v174 = vunpack.c.l.b16 %v76
    %v175 = vunpack.c.h.b16 %v76
    %v176 = vunpack.c.l.b16 %v77
    %v177 = vunpack.c.h.b16 %v77
    %v178 = vunpack.c.l.b16 %v78
    %v179 = vunpack.c.h.b16 %v78
    %v180 = vunpack.c.l.b16 %v79
    %v181 = vunpack.c.h.b16 %v79
    %v182 = vunpack.c.l.b16 %v80
    %v183 = vunpack.c.h.b16 %v80
    %v184 = vunpack.c.l.b16 %v81
    %v185 = vunpack.c.h.b16 %v81
    %v186 = vunpack.c.l.b16 %v82
    %v187 = vunpack.c.h.b16 %v82
    %v188 = vunpack.c.l.b16 %v83
    %v189 = vunpack.c.h.b16 %v83
    %v190 = vunpack.c.l.b16 %v84
    %v191 = vunpack.c.h.b16 %v84
    %v192 = vunpack.c.l.b16 %v85
    %v193 = vunpack.c.h.b16 %v85
    %v194 = vunpack.c.l.b16 %v86
    %v195 = vunpack.c.h.b16 %v86
    %v196 = vunpack.c.l.b16 %v87
    %v197 = vunpack.c.h.b16 %v87
    %v198 = vpack.c.b16 %v136, %v134
    %v199 = vpack.c.b16 %v137, %v135
    %v200 = vpack.c.b16 %v140, %v138
    %v201 = vpack.c.b16 %v141, %v139
    %v202 = vpack.c.b16 %v144, %v142
    %v203 = vpack.c.b16 %v145, %v143
    %v204 = vpack.c.b16 %v148, %v146
    %v205 = vpack.c.b16 %v149, %v147
    %v206 = vpack.c.b16 %v152, %v150
    %v207 = vpack.c.b16 %v153, %v151
    %v208 = vpack.c.b16 %v156, %v154
    %v209 = vpack.c.b16 %v157, %v155
    %v210 = vpack.c.b16 %v160, %v158
    %v211 = vpack.c.b16 %v161, %v159
    %v212 = vpack.c.b16 %v164, %v162
    %v213 = vpack.c.b16 %v165, %v163
    %v214 = vpack.c.b16 %v168, %v166
    %v215 = vpack.c.b16 %v169, %v167
    %v216 = vpack.c.b16 %v172, %v170
    %v217 = vpack.c.b16 %v173, %v171
    %v218 = vpack.c.b16 %v176, %v174
    %v219 = vpack.c.b16 %v177, %v175
    %v220 = vpack.c.b16 %v180, %v178
    %v221 = vpack.c.b16 %v181, %v179
    %v222 = vpack.c.b16 %v184, %v182
    %v223 = vpack.c.b16 %v185, %v183
    %v224 = vpack.c.b16 %v188, %v186
    %v225 = vpack.c.b16 %v189, %v187
    %v226 = vpack.c.b16 %v192, %v190
    %v227 = vpack.c.b16 %v193, %v191
    %v228 = vpack.c.b16 %v196, %v194
    %v229 = vpack.c.b16 %v197, %v195
    %262 = vmatprep.subr.bf16.mxu0 %v213
    %263 = vmatpush1.bf16.msra.mxu0 %v212
    %264 = vmatprep.subr.bf16.mxu0 %v211
    %265 = vmatpush1.bf16.msra.mxu0 %v210
    %266 = vmatprep.subr.bf16.mxu0 %v209
    %267 = vmatpush1.bf16.msra.mxu0 %v208
    %268 = vmatprep.subr.bf16.mxu0 %v207
    %269 = vmatpush1.bf16.msra.mxu0 %v206
    %270 = vmatprep.subr.bf16.mxu0 %v205
    %271 = vmatpush1.bf16.msra.mxu0 %v204
    %272 = vmatprep.subr.bf16.mxu0 %v203
    %273 = vmatpush1.bf16.msra.mxu0 %v202
    %274 = vmatprep.subr.bf16.mxu0 %v201
    %275 = vmatpush1.bf16.msra.mxu0 %v200
    %276 = vmatprep.subr.bf16.mxu0 %v199
    %277 = vmatpush1.bf16.msra.mxu0 %v198
    %278 = vmatprep.subr.bf16.mxu0 %v229
    %279 = vmatpush2.bf16.msra.mxu0 %v228
    %280 = vmatprep.subr.bf16.mxu0 %v227
    %281 = vmatpush2.bf16.msra.mxu0 %v226
    %282 = vmatprep.subr.bf16.mxu0 %v225
    %283 = vmatpush2.bf16.msra.mxu0 %v224
    %284 = vmatprep.subr.bf16.mxu0 %v223
    %285 = vmatpush2.bf16.msra.mxu0 %v222
    %286 = vmatprep.subr.bf16.mxu0 %v221
    %287 = vmatpush2.bf16.msra.mxu0 %v220
    %288 = vmatprep.subr.bf16.mxu0 %v219
    %289 = vmatpush2.bf16.msra.mxu0 %v218
    %290 = vmatprep.subr.bf16.mxu0 %v217
    %291 = vmatpush2.bf16.msra.mxu0 %v216
    %292 = vmatprep.subr.bf16.mxu0 %v215
    %293 = vmatpush2.bf16.msra.mxu0 %v214
    %294 = vmatprep.mubr.bf16.mxu0 %v95
    %295 = vmatmul.mubr.bf16.gmra.mxu0 %v94
    %v296 = vpop.f32.mrf.mxu0
    %v297 = vadd.f32 0.0, %v296
    %v298 = vpop.f32.mrf.mxu0
    %v299 = vadd.f32 0.0, %v298
    %v300 = vpop.f32.mrf.mxu0
    %v301 = vpop.f32.mrf.mxu0
    %302 = vdwg.mxu0
    %303 = vmatprep.subr.bf16.mxu0 %v213
    %304 = vmatpush1.bf16.msra.mxu0 %v212
    %305 = vmatprep.subr.bf16.mxu0 %v211
    %306 = vmatpush1.bf16.msra.mxu0 %v210
    %307 = vmatprep.subr.bf16.mxu0 %v209
    %308 = vmatpush1.bf16.msra.mxu0 %v208
    %309 = vmatprep.subr.bf16.mxu0 %v207
    %310 = vmatpush1.bf16.msra.mxu0 %v206
    %311 = vmatprep.subr.bf16.mxu0 %v205
    %312 = vmatpush1.bf16.msra.mxu0 %v204
    %313 = vmatprep.subr.bf16.mxu0 %v203
    %314 = vmatpush1.bf16.msra.mxu0 %v202
    %315 = vmatprep.subr.bf16.mxu0 %v201
    %316 = vmatpush1.bf16.msra.mxu0 %v200
    %317 = vmatprep.subr.bf16.mxu0 %v199
    %318 = vmatpush1.bf16.msra.mxu0 %v198
    %319 = vmatprep.subr.bf16.mxu0 %v229
    %320 = vmatpush2.bf16.msra.mxu0 %v228
    %321 = vmatprep.subr.bf16.mxu0 %v227
    %322 = vmatpush2.bf16.msra.mxu0 %v226
    %323 = vmatprep.subr.bf16.mxu0 %v225
    %324 = vmatpush2.bf16.msra.mxu0 %v224
    %325 = vmatprep.subr.bf16.mxu0 %v223
    %326 = vmatpush2.bf16.msra.mxu0 %v222
    %327 = vmatprep.subr.bf16.mxu0 %v221
    %328 = vmatpush2.bf16.msra.mxu0 %v220
    %329 = vmatprep.subr.bf16.mxu0 %v219
    %330 = vmatpush2.bf16.msra.mxu0 %v218
    %331 = vmatprep.subr.bf16.mxu0 %v217
    %332 = vmatpush2.bf16.msra.mxu0 %v216
    %333 = vmatprep.subr.bf16.mxu0 %v215
    %334 = vmatpush2.bf16.msra.mxu0 %v214
    %335 = vmatprep.mubr.bf16.mxu0 %v89
    %336 = vmatmul.mubr.bf16.gmra.mxu0 %v88
    %v337 = vpop.f32.mrf.mxu0
    %v338 = vadd.f32 %v297, %v337
    %v339 = vpop.f32.mrf.mxu0
    %v340 = vadd.f32 %v299, %v339
    %v341 = vpop.f32.mrf.mxu0
    %v342 = vpop.f32.mrf.mxu0
    %343 = vdwg.mxu0
    %344 = vmatprep.subr.bf16.mxu0 %v213
    %345 = vmatpush1.bf16.msra.mxu0 %v212
    %346 = vmatprep.subr.bf16.mxu0 %v211
    %347 = vmatpush1.bf16.msra.mxu0 %v210
    %348 = vmatprep.subr.bf16.mxu0 %v209
    %349 = vmatpush1.bf16.msra.mxu0 %v208
    %350 = vmatprep.subr.bf16.mxu0 %v207
    %351 = vmatpush1.bf16.msra.mxu0 %v206
    %352 = vmatprep.subr.bf16.mxu0 %v205
    %353 = vmatpush1.bf16.msra.mxu0 %v204
    %354 = vmatprep.subr.bf16.mxu0 %v203
    %355 = vmatpush1.bf16.msra.mxu0 %v202
    %356 = vmatprep.subr.bf16.mxu0 %v201
    %357 = vmatpush1.bf16.msra.mxu0 %v200
    %358 = vmatprep.subr.bf16.mxu0 %v199
    %359 = vmatpush1.bf16.msra.mxu0 %v198
    %360 = vmatprep.subr.bf16.mxu0 %v229
    %361 = vmatpush2.bf16.msra.mxu0 %v228
    %362 = vmatprep.subr.bf16.mxu0 %v227
    %363 = vmatpush2.bf16.msra.mxu0 %v226
    %364 = vmatprep.subr.bf16.mxu0 %v225
    %365 = vmatpush2.bf16.msra.mxu0 %v224
    %366 = vmatprep.subr.bf16.mxu0 %v223
    %367 = vmatpush2.bf16.msra.mxu0 %v222
    %368 = vmatprep.subr.bf16.mxu0 %v221
    %369 = vmatpush2.bf16.msra.mxu0 %v220
    %370 = vmatprep.subr.bf16.mxu0 %v219
    %371 = vmatpush2.bf16.msra.mxu0 %v218
    %372 = vmatprep.subr.bf16.mxu0 %v217
    %373 = vmatpush2.bf16.msra.mxu0 %v216
    %374 = vmatprep.subr.bf16.mxu0 %v215
    %375 = vmatpush2.bf16.msra.mxu0 %v214
    %376 = vmatprep.mubr.bf16.mxu0 %v101
    %377 = vmatmul.mubr.bf16.gmra.mxu0 %v100
    %v378 = vpop.f32.mrf.mxu0
    %v379 = vadd.f32 0.0, %v378
    %v380 = vpop.f32.mrf.mxu0
    %v381 = vadd.f32 0.0, %v380
    %v382 = vpop.f32.mrf.mxu0
    %v383 = vpop.f32.mrf.mxu0
    %384 = vdwg.mxu0
    %v385 = vadd.f32 %v338, %v379
    %v386 = vadd.f32 %v340, %v381
    %s387 = sld [smem:[#allocation8]]
    %s388 = sld [smem:[#allocation8 + $0x1]]
    %s389 = sld [smem:[#allocation8 + $0x2]]
    %v390 = vstv %s387
    %v391 = vmul.f32 %v385, %v390
    %v392 = vstv %s388
    %v393 = vmul.f32 %v386, %v392
    %v394 = vadd.f32 %v391, %v393
    %v395 = vstv %s389
    %v396 = vadd.f32 %v394, %v395
    %v397 = vmul.f32 %v396, 0.5
    %v398 = vtanh.pop %v397
    %v399 = vmul.f32 %v398, 0.5
    %v400 = vadd.f32 %v399, 0.5
    %401 = vst [vmem:[#allocation9] sm:$0xff] %v400
    // Predicated region
    $region26: #{tpu_custom_call.1} parent=1 // pred_check
      _
    $region27: #{tpu_custom_call.1} parent=1 // pred_check_branch
      %403 = sbr.rel (0) target = $region29
    $region28: #{tpu_custom_call.1} parent=1 // pred_region
      %s405 = ssub.s32 128, 128
      %406 = vsyncadd [#allocation4], %s405
      %s408 = sshll.u32 [#allocation9], 4
      %s409 = int_to_ptr.vmem [resolvable:$true] %s408
      %411 = dma.vmem_to_hbm [thread:$0]  %s409, 128, %s3, [#allocation4]
    $region29: #{tpu_custom_call.1} parent=1 // pred_fallthru
      _
    // Predicated region
    $region30: #{tpu_custom_call.1} parent=1 // pred_check
      _
    $region31: #{tpu_custom_call.1} parent=1 // pred_check_branch
      %413 = sbr.rel (0) target = $region33
    $region32: #{tpu_custom_call.1} parent=1 // pred_region
      %414 = dma.done [#allocation4], 128
    $region33: #{tpu_custom_call.1} parent=1 // pred_fallthru
      _
    %415 = vsyncpa [#allocation3], 1
    %416 = vsyncpa [#allocation7], 1
    %417 = vsyncpa [#allocation4], 1
    %418 = vsyncpa [#allocation5], 1

</llo_original>
